<compile_context>
chip_gen: v6e
topology: v6e:2x2x1
jax: 0.10.0
libtpu: 0.0.40
codegen_flags: <defaults>
</compile_context>

<pallas_src>
import numpy as np
import jax
import jax.numpy as jnp
from jax.experimental import pallas as pl
from jax.experimental.pallas import tpu as pltpu

NDF = 16            # opt.ngf
ISIZE = 32          # forced by feature_dec output width
BN_EPS = 1e-5
NEG_SLOPE = 0.2
WIDTH = 16 * NDF    # 256: flat (L*C) activation width at every stage


# ----------------------------- kernel helpers ------------------------------
def _leaky(x):
    # LeakyReLU(0.2): max(x, 0.2*x)
    return jnp.maximum(x, NEG_SLOPE * x)


def _dot_bf16(a, b_bf16):
    # MXU dot: bf16 operands, f32 accumulation.
    return jax.lax.dot_general(
        a.astype(jnp.bfloat16), b_bf16,
        (((1,), (0,)), ((), ())),
        preferred_element_type=jnp.float32)


def _coset_mean(row, group):
    """Mean over all lanes sharing (lane mod group), broadcast back to width.

    row: (1, width) f32, width a power-of-two multiple of `group`.
    Log-step rotate-and-add on the XLU (replaces the old P matmuls).
    """
    width = row.shape[-1]
    s = row
    shift = width // 2
    while shift >= group:
        s = s + pltpu.roll(s, shift, axis=1)
        shift //= 2
    return s * (float(group) / float(width))


def _bn_flat(a, group, gamma, beta):
    """BatchNorm1d, training mode (batch stats, biased variance) on
    channels-last flattened activations.

    a:            (B, L*C) f32, flat index = l*C + c,  group == C
    gamma, beta:  (1, L*C) per-channel params tiled over L
    """
    bm = jnp.mean(a, axis=0, keepdims=True)            # (1, L*C) batch mean
    mean = _coset_mean(bm, group)                      # per-channel mean, bcast
    d = a - mean
    bv = jnp.mean(d * d, axis=0, keepdims=True)        # (1, L*C)
    var = _coset_mean(bv, group)                       # per-channel biased var
    inv = jax.lax.rsqrt(var + BN_EPS)
    return d * (gamma * inv) + beta


# --------------------------------- kernel ----------------------------------
def netd_kernel(x_ref, weff_ref, m2_ref, m3_ref, wc_ref, vec_ref,
                cls_ref, feat_ref):
    vecs = vec_ref[...]                                # (8, 256) f32 packed
    beff = vecs[0:1, :]
    g2, b2 = vecs[1:2, :], vecs[2:3, :]
    g3, b3 = vecs[3:4, :], vecs[4:5, :]

    # fused feature_dec(Linear) + Conv1d(1->ndf,4,2,1) + LeakyReLU
    a = _leaky(_dot_bf16(x_ref[...], weff_ref[...]) + beff)        # (B, 256)

    # pyramid 1: conv(ndf->2ndf,4,2,1) as one dense matmul + BN + LeakyReLU
    a = _dot_bf16(a, m2_ref[...])                                  # (B, 256)
    a = _leaky(_bn_flat(a, 2 * NDF, g2, b2))

    # pyramid 2: conv(2ndf->4ndf,4,2,1) + BN + LeakyReLU -> features
    a = _dot_bf16(a, m3_ref[...])                                  # (B, 256)
    feats = _leaky(_bn_flat(a, 4 * NDF, g3, b3))
    feat_ref[...] = feats                                          # lane-dense

    # classifier: Conv1d(4ndf,1,4,1,0,bias=False) + Sigmoid.  wc is padded to
    # 128 lanes so this store is lane-dense; the real logit is column 0.
    z = _dot_bf16(feats, wc_ref[...])                              # (B, 128)
    e = jnp.exp(-jnp.abs(z))                                       # stable sigmoid
    cls_ref[...] = jnp.where(z >= 0.0, 1.0, e) / (1.0 + e)


# ------------------------ one-time parameter folding ------------------------
def _stride2_indicator(l_in, l_out):
    # ind[k, l_in, l_out] = 1 iff conv tap k at output l_out reads input l_in
    # (kernel=4, stride=2, pad=1); out-of-range taps have no 1 anywhere, which
    # folds the zero padding into the conv matrix.
    k = np.arange(4)[:, None, None]
    li = np.arange(l_in)[None, :, None]
    lo = np.arange(l_out)[None, None, :]
    return (li == 2 * lo + k - 1).astype(np.float32)


def _conv_as_matrix(w_kio, l_in, l_out):
    """(4, Cin, Cout) conv weight -> dense (L_in*Cin, L_out*Cout) matrix."""
    _, cin, cout = w_kio.shape
    ind = jnp.asarray(_stride2_indicator(l_in, l_out))            # (4,Lin,Lout)
    m = jnp.einsum('kio,kab->aibo', w_kio, ind)                   # (Lin,Cin,Lout,Cout)
    return m.reshape(l_in * cin, l_out * cout)


def prepare_params(params):
    """One-time fold of NetD params into kernel operands (call once, reuse)."""
    hp = jax.lax.Precision.HIGHEST

    # Fold Linear(F,32)+bias with the first conv (Cin=1, bias=False).
    m1 = _conv_as_matrix(params['w1'], ISIZE, ISIZE // 2)          # (32, 256)
    weff = jnp.dot(params['wfd'], m1, precision=hp)                # (F, 256)
    beff = jnp.dot(params['bfd'], m1, precision=hp)                # (1, 256)

    m2 = _conv_as_matrix(params['w2'], 16, 8)                      # (256, 256)
    m3 = _conv_as_matrix(params['w3'], 8, 4)                       # (256, 256)

    # per-channel BN params tiled over L (flat index = l*C + c)
    g2 = jnp.tile(params['g2'], 8)[None]
    b2 = jnp.tile(params['b2'], 8)[None]
    g3 = jnp.tile(params['g3'], 4)[None]
    b3 = jnp.tile(params['b3'], 4)[None]
    vecs = jnp.concatenate(
        [beff, g2, b2, g3, b3, jnp.zeros((3, WIDTH), jnp.float32)], axis=0)

    # Classifier Conv1d(4ndf,1,4,1,0): flat weight index = k*4ndf + c, padded
    # to 128 lanes (column 0 real) so the kernel's output store is lane-dense.
    wc_flat = params['wc'].reshape(-1)                             # (256,)
    wc_pad = jnp.zeros((WIDTH, 128), jnp.float32).at[:, 0].set(wc_flat)

    return {
        'weff': weff.astype(jnp.bfloat16),
        'm2':   m2.astype(jnp.bfloat16),
        'm3':   m3.astype(jnp.bfloat16),
        'wc':   wc_pad.astype(jnp.bfloat16),
        'vecs': vecs,                                              # f32
    }


@jax.jit
def netd_forward(x, kp):
    """x: (B, feature_number) f32; kp: output of prepare_params()."""
    B = x.shape[0]
    vmem = pl.BlockSpec(memory_space=pltpu.MemorySpace.VMEM)
    cls_slab, feat_flat = pl.pallas_call(
        netd_kernel,
        out_shape=(
            jax.ShapeDtypeStruct((B, 128), jnp.float32),           # lane-dense
            jax.ShapeDtypeStruct((B, WIDTH), jnp.float32),         # lane-dense
        ),
        in_specs=[vmem] * 6,
        out_specs=(vmem, vmem),
    )(x, kp['weff'], kp['m2'], kp['m3'], kp['wc'], kp['vecs'])

    classifier = cls_slab[:, 0]                                    # (B,)
    # channels-last flattened (B, L*C) -> PyTorch NCL (B, 4*ndf, 4)
    features = jnp.transpose(feat_flat.reshape(B, 4, 4 * NDF), (0, 2, 1))
    return classifier, features


# --------------------------- deterministic params --------------------------
def init_params(key, feature_number, ndf=NDF):
    ks = jax.random.split(key, 10)

    def nrm(k, shape, scale=0.1):
        return (scale * jax.random.normal(k, shape)).astype(jnp.float32)

    return {
        # Linear(feature_number, 32): weight stored transposed (F, 32)
        'wfd': nrm(ks[0], (feature_number, 32)),
        'bfd': nrm(ks[1], (1, 32)),
        # Conv weights stored as (k, Cin, Cout)
        'w1':  nrm(ks[2], (4, 1, ndf)),
        'w2':  nrm(ks[3], (4, ndf, 2 * ndf)),
        'g2':  (1.0 + nrm(ks[4], (2 * ndf,), 0.05)).astype(jnp.float32),
        'b2':  nrm(ks[5], (2 * ndf,), 0.05),
        'w3':  nrm(ks[6], (4, 2 * ndf, 4 * ndf)),
        'g3':  (1.0 + nrm(ks[7], (4 * ndf,), 0.05)).astype(jnp.float32),
        'b3':  nrm(ks[8], (4 * ndf,), 0.05),
        # final Conv1d(4ndf, 1, 4): stored as (t, c)
        'wc':  nrm(ks[9], (4, 4 * ndf)),
    }


# ------------------------- pure-JAX reference check ------------------------
def ref_forward(x, params, ndf=NDF):
    hp = jax.lax.Precision.HIGHEST

    def conv(inp, w_oik, stride, pad):
        return jax.lax.conv_general_dilated(
            inp, w_oik, (stride,), [(pad, pad)],
            dimension_numbers=('NCH', 'OIH', 'NCH'), precision=hp)

    def bn(inp, gamma, beta):
        mean = jnp.mean(inp, axis=(0, 2), keepdims=True)
        var = jnp.mean((inp - mean) ** 2, axis=(0, 2), keepdims=True)
        return ((inp - mean) / jnp.sqrt(var + BN_EPS)
                * gamma[None, :, None] + beta[None, :, None])

    lrelu = lambda t: jnp.maximum(t, NEG_SLOPE * t)

    h = jnp.dot(x, params['wfd'], precision=hp) + params['bfd'][0]
    a = h[:, None, :]                                              # (B, 1, 32)
    w1 = jnp.transpose(params['w1'], (2, 1, 0))                    # (ndf, 1, 4)
    a = lrelu(conv(a, w1, 2, 1))
    w2 = jnp.transpose(params['w2'], (2, 1, 0))
    a = lrelu(bn(conv(a, w2, 2, 1), params['g2'], params['b2']))
    w3 = jnp.transpose(params['w3'], (2, 1, 0))
    feats = lrelu(bn(conv(a, w3, 2, 1), params['g3'], params['b3']))
    wc = jnp.transpose(params['wc'], (1, 0))[None]                 # (1, 4ndf, 4)
    z = conv(feats, wc, 1, 0)[:, 0, 0]
    return jax.nn.sigmoid(z), feats


# ----------------------------------- main -----------------------------------
if __name__ == "__main__":
    key = jax.random.PRNGKey(0)
    kx, kparam = jax.random.split(key)
    B, FEATURE_NUMBER = 8, 64
    x = jax.random.normal(kx, (B, FEATURE_NUMBER), dtype=jnp.float32)
    params = init_params(kparam, FEATURE_NUMBER)

    # One-time constant folding (hoisted out of the per-step forward).
    kernel_params = jax.block_until_ready(prepare_params(params))

    classifier, features = jax.block_until_ready(netd_forward(x, kernel_params))

    assert classifier.shape == (B,)
    assert features.shape == (B, 4 * NDF, 4)

    ref_cls, ref_feats = ref_forward(x, params)
    # bf16 MXU operands (f32 accumulation) => slightly looser tolerance than f32.
    assert jnp.allclose(classifier, ref_cls, atol=5e-2, rtol=5e-2), \
        float(jnp.max(jnp.abs(classifier - ref_cls)))
    assert jnp.allclose(features, ref_feats, atol=5e-2, rtol=5e-2), \
        float(jnp.max(jnp.abs(features - ref_feats)))

    print("KERNEL_OK")
</pallas_src>

<mosaic_0001>
module attributes {stable_mosaic.version = 11 : i64} {
  func.func @netd_kernel(%arg0: memref<8x64xf32, #tpu.memory_space<vmem>>, %arg1: memref<64x256xbf16, #tpu.memory_space<vmem>>, %arg2: memref<256x256xbf16, #tpu.memory_space<vmem>>, %arg3: memref<256x256xbf16, #tpu.memory_space<vmem>>, %arg4: memref<256x128xbf16, #tpu.memory_space<vmem>>, %arg5: memref<8x256xf32, #tpu.memory_space<vmem>>, %arg6: memref<8x128xf32, #tpu.memory_space<vmem>>, %arg7: memref<8x256xf32, #tpu.memory_space<vmem>>) attributes {dimension_semantics = [], scalar_prefetch = 0 : i64, scratch_operands = 0 : i64, tpu.core_type = #tpu.core_type<tc>} {
    %c0 = arith.constant 0 : index
    %c0_0 = arith.constant 0 : index
    %0 = vector.load %arg5[%c0, %c0_0] : memref<8x256xf32, #tpu.memory_space<vmem>>, vector<8x256xf32>
    %1 = vector.extract_strided_slice %0 {offsets = [0, 0], sizes = [1, 256], strides = [1, 1]} : vector<8x256xf32> to vector<1x256xf32>
    %2 = vector.extract_strided_slice %0 {offsets = [1, 0], sizes = [1, 256], strides = [1, 1]} : vector<8x256xf32> to vector<1x256xf32>
    %3 = vector.extract_strided_slice %0 {offsets = [2, 0], sizes = [1, 256], strides = [1, 1]} : vector<8x256xf32> to vector<1x256xf32>
    %4 = vector.extract_strided_slice %0 {offsets = [3, 0], sizes = [1, 256], strides = [1, 1]} : vector<8x256xf32> to vector<1x256xf32>
    %5 = vector.extract_strided_slice %0 {offsets = [4, 0], sizes = [1, 256], strides = [1, 1]} : vector<8x256xf32> to vector<1x256xf32>
    %c0_1 = arith.constant 0 : index
    %c0_2 = arith.constant 0 : index
    %6 = vector.load %arg0[%c0_1, %c0_2] : memref<8x64xf32, #tpu.memory_space<vmem>>, vector<8x64xf32>
    %c0_3 = arith.constant 0 : index
    %c0_4 = arith.constant 0 : index
    %7 = vector.load %arg1[%c0_3, %c0_4] : memref<64x256xbf16, #tpu.memory_space<vmem>>, vector<64x256xbf16>
    %8 = arith.truncf %6 : vector<8x64xf32> to vector<8x64xbf16>
    %cst = arith.constant dense<0.000000e+00> : vector<8x256xf32>
    %9 = tpu.matmul %8, %7, %cst {dimension_numbers = #tpu.dot_dimension_numbers<[1], [0], [0], [1], [0, 0, 1, 1], [], []>} : vector<8x64xbf16>, vector<64x256xbf16>, vector<8x256xf32> -> vector<8x256xf32>
    %10 = vector.broadcast %1 : vector<1x256xf32> to vector<8x256xf32>
    %11 = arith.addf %9, %10 : vector<8x256xf32>
    %cst_5 = arith.constant 2.000000e-01 : f32
    %12 = vector.broadcast %cst_5 : f32 to vector<8x256xf32>
    %13 = arith.mulf %12, %11 : vector<8x256xf32>
    %14 = arith.maximumf %11, %13 : vector<8x256xf32>
    %c0_6 = arith.constant 0 : index
    %c0_7 = arith.constant 0 : index
    %15 = vector.load %arg2[%c0_6, %c0_7] : memref<256x256xbf16, #tpu.memory_space<vmem>>, vector<256x256xbf16>
    %16 = arith.truncf %14 : vector<8x256xf32> to vector<8x256xbf16>
    %cst_8 = arith.constant dense<0.000000e+00> : vector<8x256xf32>
    %17 = tpu.matmul %16, %15, %cst_8 {dimension_numbers = #tpu.dot_dimension_numbers<[1], [0], [0], [1], [0, 0, 1, 1], [], []>} : vector<8x256xbf16>, vector<256x256xbf16>, vector<8x256xf32> -> vector<8x256xf32>
    %cst_9 = arith.constant dense<0.000000e+00> : vector<256xf32>
    %18 = vector.multi_reduction <add>, %17, %cst_9 [0] : vector<8x256xf32> to vector<256xf32>
    %19 = vector.shape_cast %18 : vector<256xf32> to vector<1x256xf32>
    %cst_10 = arith.constant 8.000000e+00 : f32
    %20 = vector.broadcast %cst_10 : f32 to vector<1x256xf32>
    %21 = arith.divf %19, %20 : vector<1x256xf32>
    %c128_i32 = arith.constant 128 : i32
    %22 = tpu.dynamic_rotate %21 by %c128_i32 dim 1 : vector<1x256xf32>, i32 -> vector<1x256xf32>
    %23 = arith.addf %21, %22 : vector<1x256xf32>
    %c64_i32 = arith.constant 64 : i32
    %24 = tpu.dynamic_rotate %23 by %c64_i32 dim 1 : vector<1x256xf32>, i32 -> vector<1x256xf32>
    %25 = arith.addf %23, %24 : vector<1x256xf32>
    %c32_i32 = arith.constant 32 : i32
    %26 = tpu.dynamic_rotate %25 by %c32_i32 dim 1 : vector<1x256xf32>, i32 -> vector<1x256xf32>
    %27 = arith.addf %25, %26 : vector<1x256xf32>
    %cst_11 = arith.constant 1.250000e-01 : f32
    %28 = vector.broadcast %cst_11 : f32 to vector<1x256xf32>
    %29 = arith.mulf %27, %28 : vector<1x256xf32>
    %30 = vector.broadcast %29 : vector<1x256xf32> to vector<8x256xf32>
    %31 = arith.subf %17, %30 : vector<8x256xf32>
    %32 = arith.mulf %31, %31 : vector<8x256xf32>
    %cst_12 = arith.constant dense<0.000000e+00> : vector<256xf32>
    %33 = vector.multi_reduction <add>, %32, %cst_12 [0] : vector<8x256xf32> to vector<256xf32>
    %34 = vector.shape_cast %33 : vector<256xf32> to vector<1x256xf32>
    %cst_13 = arith.constant 8.000000e+00 : f32
    %35 = vector.broadcast %cst_13 : f32 to vector<1x256xf32>
    %36 = arith.divf %34, %35 : vector<1x256xf32>
    %c128_i32_14 = arith.constant 128 : i32
    %37 = tpu.dynamic_rotate %36 by %c128_i32_14 dim 1 : vector<1x256xf32>, i32 -> vector<1x256xf32>
    %38 = arith.addf %36, %37 : vector<1x256xf32>
    %c64_i32_15 = arith.constant 64 : i32
    %39 = tpu.dynamic_rotate %38 by %c64_i32_15 dim 1 : vector<1x256xf32>, i32 -> vector<1x256xf32>
    %40 = arith.addf %38, %39 : vector<1x256xf32>
    %c32_i32_16 = arith.constant 32 : i32
    %41 = tpu.dynamic_rotate %40 by %c32_i32_16 dim 1 : vector<1x256xf32>, i32 -> vector<1x256xf32>
    %42 = arith.addf %40, %41 : vector<1x256xf32>
    %cst_17 = arith.constant 1.250000e-01 : f32
    %43 = vector.broadcast %cst_17 : f32 to vector<1x256xf32>
    %44 = arith.mulf %42, %43 : vector<1x256xf32>
    %cst_18 = arith.constant 9.99999974E-6 : f32
    %45 = vector.broadcast %cst_18 : f32 to vector<1x256xf32>
    %46 = arith.addf %44, %45 : vector<1x256xf32>
    %47 = math.rsqrt %46 : vector<1x256xf32>
    %48 = arith.mulf %2, %47 : vector<1x256xf32>
    %49 = vector.broadcast %48 : vector<1x256xf32> to vector<8x256xf32>
    %50 = arith.mulf %31, %49 : vector<8x256xf32>
    %51 = vector.broadcast %3 : vector<1x256xf32> to vector<8x256xf32>
    %52 = arith.addf %50, %51 : vector<8x256xf32>
    %cst_19 = arith.constant 2.000000e-01 : f32
    %53 = vector.broadcast %cst_19 : f32 to vector<8x256xf32>
    %54 = arith.mulf %53, %52 : vector<8x256xf32>
    %55 = arith.maximumf %52, %54 : vector<8x256xf32>
    %c0_20 = arith.constant 0 : index
    %c0_21 = arith.constant 0 : index
    %56 = vector.load %arg3[%c0_20, %c0_21] : memref<256x256xbf16, #tpu.memory_space<vmem>>, vector<256x256xbf16>
    %57 = arith.truncf %55 : vector<8x256xf32> to vector<8x256xbf16>
    %cst_22 = arith.constant dense<0.000000e+00> : vector<8x256xf32>
    %58 = tpu.matmul %57, %56, %cst_22 {dimension_numbers = #tpu.dot_dimension_numbers<[1], [0], [0], [1], [0, 0, 1, 1], [], []>} : vector<8x256xbf16>, vector<256x256xbf16>, vector<8x256xf32> -> vector<8x256xf32>
    %cst_23 = arith.constant dense<0.000000e+00> : vector<256xf32>
    %59 = vector.multi_reduction <add>, %58, %cst_23 [0] : vector<8x256xf32> to vector<256xf32>
    %60 = vector.shape_cast %59 : vector<256xf32> to vector<1x256xf32>
    %cst_24 = arith.constant 8.000000e+00 : f32
    %61 = vector.broadcast %cst_24 : f32 to vector<1x256xf32>
    %62 = arith.divf %60, %61 : vector<1x256xf32>
    %c128_i32_25 = arith.constant 128 : i32
    %63 = tpu.dynamic_rotate %62 by %c128_i32_25 dim 1 : vector<1x256xf32>, i32 -> vector<1x256xf32>
    %64 = arith.addf %62, %63 : vector<1x256xf32>
    %c64_i32_26 = arith.constant 64 : i32
    %65 = tpu.dynamic_rotate %64 by %c64_i32_26 dim 1 : vector<1x256xf32>, i32 -> vector<1x256xf32>
    %66 = arith.addf %64, %65 : vector<1x256xf32>
    %cst_27 = arith.constant 2.500000e-01 : f32
    %67 = vector.broadcast %cst_27 : f32 to vector<1x256xf32>
    %68 = arith.mulf %66, %67 : vector<1x256xf32>
    %69 = vector.broadcast %68 : vector<1x256xf32> to vector<8x256xf32>
    %70 = arith.subf %58, %69 : vector<8x256xf32>
    %71 = arith.mulf %70, %70 : vector<8x256xf32>
    %cst_28 = arith.constant dense<0.000000e+00> : vector<256xf32>
    %72 = vector.multi_reduction <add>, %71, %cst_28 [0] : vector<8x256xf32> to vector<256xf32>
    %73 = vector.shape_cast %72 : vector<256xf32> to vector<1x256xf32>
    %cst_29 = arith.constant 8.000000e+00 : f32
    %74 = vector.broadcast %cst_29 : f32 to vector<1x256xf32>
    %75 = arith.divf %73, %74 : vector<1x256xf32>
    %c128_i32_30 = arith.constant 128 : i32
    %76 = tpu.dynamic_rotate %75 by %c128_i32_30 dim 1 : vector<1x256xf32>, i32 -> vector<1x256xf32>
    %77 = arith.addf %75, %76 : vector<1x256xf32>
    %c64_i32_31 = arith.constant 64 : i32
    %78 = tpu.dynamic_rotate %77 by %c64_i32_31 dim 1 : vector<1x256xf32>, i32 -> vector<1x256xf32>
    %79 = arith.addf %77, %78 : vector<1x256xf32>
    %cst_32 = arith.constant 2.500000e-01 : f32
    %80 = vector.broadcast %cst_32 : f32 to vector<1x256xf32>
    %81 = arith.mulf %79, %80 : vector<1x256xf32>
    %cst_33 = arith.constant 9.99999974E-6 : f32
    %82 = vector.broadcast %cst_33 : f32 to vector<1x256xf32>
    %83 = arith.addf %81, %82 : vector<1x256xf32>
    %84 = math.rsqrt %83 : vector<1x256xf32>
    %85 = arith.mulf %4, %84 : vector<1x256xf32>
    %86 = vector.broadcast %85 : vector<1x256xf32> to vector<8x256xf32>
    %87 = arith.mulf %70, %86 : vector<8x256xf32>
    %88 = vector.broadcast %5 : vector<1x256xf32> to vector<8x256xf32>
    %89 = arith.addf %87, %88 : vector<8x256xf32>
    %cst_34 = arith.constant 2.000000e-01 : f32
    %90 = vector.broadcast %cst_34 : f32 to vector<8x256xf32>
    %91 = arith.mulf %90, %89 : vector<8x256xf32>
    %92 = arith.maximumf %89, %91 : vector<8x256xf32>
    %c0_35 = arith.constant 0 : index
    %c0_36 = arith.constant 0 : index
    %93 = vector.load %arg7[%c0_35, %c0_36] : memref<8x256xf32, #tpu.memory_space<vmem>>, vector<8x256xf32>
    tpu.vector_store %arg7[%c0_35, %c0_36], %92 {strides = array<i32>} : memref<8x256xf32, #tpu.memory_space<vmem>>, vector<8x256xf32>,
    %c0_37 = arith.constant 0 : index
    %c0_38 = arith.constant 0 : index
    %94 = vector.load %arg4[%c0_37, %c0_38] : memref<256x128xbf16, #tpu.memory_space<vmem>>, vector<256x128xbf16>
    %95 = arith.truncf %92 : vector<8x256xf32> to vector<8x256xbf16>
    %cst_39 = arith.constant dense<0.000000e+00> : vector<8x128xf32>
    %96 = tpu.matmul %95, %94, %cst_39 {dimension_numbers = #tpu.dot_dimension_numbers<[1], [0], [0], [1], [0, 0, 1, 1], [], []>} : vector<8x256xbf16>, vector<256x128xbf16>, vector<8x128xf32> -> vector<8x128xf32>
    %97 = math.absf %96 : vector<8x128xf32>
    %cst_40 = arith.constant 0.000000e+00 : f32
    %98 = vector.broadcast %cst_40 : f32 to vector<8x128xf32>
    %99 = arith.subf %98, %97 : vector<8x128xf32>
    %100 = math.exp %99 : vector<8x128xf32>
    %cst_41 = arith.constant 0.000000e+00 : f32
    %101 = vector.broadcast %cst_41 : f32 to vector<8x128xf32>
    %102 = arith.cmpf oge, %96, %101 : vector<8x128xf32>
    %cst_42 = arith.constant 1.000000e+00 : f32
    %103 = vector.broadcast %cst_42 : f32 to vector<8x128xf32>
    %104 = arith.select %102, %103, %100 : vector<8x128xi1>, vector<8x128xf32>
    %cst_43 = arith.constant 1.000000e+00 : f32
    %105 = vector.broadcast %cst_43 : f32 to vector<8x128xf32>
    %106 = arith.addf %105, %100 : vector<8x128xf32>
    %107 = arith.divf %104, %106 : vector<8x128xf32>
    %c0_44 = arith.constant 0 : index
    %c0_45 = arith.constant 0 : index
    %108 = vector.load %arg6[%c0_44, %c0_45] : memref<8x128xf32, #tpu.memory_space<vmem>>, vector<8x128xf32>
    tpu.vector_store %arg6[%c0_44, %c0_45], %107 {strides = array<i32>} : memref<8x128xf32, #tpu.memory_space<vmem>>, vector<8x128xf32>,
    return
  }
}

</mosaic_0001>

<llo_original>
// kernel: netd_forward.1
$region0: #{netd_forward.1}
  #allocation0 [shape = 'u32[]', space=smem, size = 0x4, offset = 0x4, fixed_abs, tag = 'smem constant byte address 0x4 - core index']
  #allocation1 [shape = 'u32[144,128]{1,0:T(1,128)}', space=vmem, size = 0x12000, scoped, tag = 'internal scratch']
  %s0 = inlined_call_operand.hbm [shape: f32[8,64], index: 0, kind: input, shape index: {}]
  %s1 = inlined_call_operand.hbm [shape: bf16[64,256], index: 1, kind: input, shape index: {}]
  %s2 = inlined_call_operand.hbm [shape: bf16[256,256], index: 2, kind: input, shape index: {}]
  %s3 = inlined_call_operand.hbm [shape: bf16[256,256], index: 3, kind: input, shape index: {}]
  %s4 = inlined_call_operand.hbm [shape: bf16[256,128], index: 4, kind: input, shape index: {}]
  %s5 = inlined_call_operand.hbm [shape: f32[8,256], index: 5, kind: input, shape index: {}]
  %s6 = inlined_call_operand.vmem [shape: f32[8,128], index: 6, kind: output, shape index: {0}]
  %s7 = inlined_call_operand.vmem [shape: f32[8,256], index: 7, kind: output, shape index: {1}]
  %8 = xla_tuple %s6, %s7
  %s9 = sld [smem:[#allocation0]]
  $region66: #{netd_forward.1} parent=0
    _
  %s11 = ssub.s32 1, %s9
  %s12 = scalar_select 0, %s11, %s9
  $region1: #{netd_forward.1} parent=0
    #allocation2 [shape = 'u8[4096]{0}', space=vmem, size = 0x1000, scoped, tag = 'input window, operand 0, single buffered']
    #allocation3 [shape = 's32[1]{0}', space=sflag, size = 0x4, scoped, tag = 'scoped memory for netd_forward.1']
    #allocation4 [shape = 'u8[32768]{0}', space=vmem, size = 0x8000, scoped, tag = 'input window, operand 1, single buffered']
    #allocation5 [shape = 's32[1]{0}', space=sflag, size = 0x4, scoped, tag = 'scoped memory for netd_forward.1']
    #allocation6 [shape = 'u8[131072]{0}', space=vmem, size = 0x20000, scoped, tag = 'input window, operand 2, single buffered']
    #allocation7 [shape = 'u8[131072]{0}', space=vmem, size = 0x20000, scoped, tag = 'input window, operand 3, single buffered']
    #allocation8 [shape = 's32[1]{0}', space=sflag, size = 0x4, scoped, tag = 'scoped memory for netd_forward.1']
    #allocation9 [shape = 'u8[65536]{0}', space=vmem, size = 0x10000, scoped, tag = 'input window, operand 4, single buffered']
    #allocation10 [shape = 'u8[8192]{0}', space=vmem, size = 0x2000, scoped, tag = 'input window, operand 5, single buffered']
    #allocation11 [shape = 's32[1]{0}', space=sflag, size = 0x4, scoped, tag = 'scoped memory for netd_forward.1']
    %13 = vsyncpa [#allocation3], 0
    %14 = vsyncpa [#allocation5], 0
    %15 = vsyncpa [#allocation8], 0
    %16 = vsyncpa [#allocation11], 0
    // Predicated region
    $region2: #{netd_forward.1} parent=1 // pred_check
      _
    $region3: #{netd_forward.1} parent=1 // pred_check_branch
      %18 = sbr.rel (0) target = $region5
    $region4: #{netd_forward.1} parent=1 // pred_region
      %s20 = ssub.s32 128, 128
      %21 = vsyncadd [#allocation3], %s20
      %s23 = sshll.u32 [#allocation2], 4
      %s24 = int_to_ptr.vmem [resolvable:$true] %s23
      %26 = dma.hbm_to_vmem [thread:$0]  %s0, 128, %s24, [#allocation3]
    $region5: #{netd_forward.1} parent=1 // pred_fallthru
      _
    // Predicated region
    $region6: #{netd_forward.1} parent=1 // pred_check
      _
    $region7: #{netd_forward.1} parent=1 // pred_check_branch
      %28 = sbr.rel (0) target = $region9
    $region8: #{netd_forward.1} parent=1 // pred_region
      %s30 = ssub.s32 1024, 1024
      %31 = vsyncadd [#allocation5], %s30
      %s32 = sshll.u32 [#allocation4], 4
      %s33 = int_to_ptr.vmem [resolvable:$true] %s32
      %38 = dma.hbm_to_vmem [thread:$0]  %s1, 1024, %s33, [#allocation5], 128, 128, 8
    $region9: #{netd_forward.1} parent=1 // pred_fallthru
      _
    // Predicated region
    $region10: #{netd_forward.1} parent=1 // pred_check
      _
    $region11: #{netd_forward.1} parent=1 // pred_check_branch
      %40 = sbr.rel (0) target = $region13
    $region12: #{netd_forward.1} parent=1 // pred_region
      %s42 = ssub.s32 4096, 4096
      %43 = vsyncadd [#allocation5], %s42
      %s44 = sshll.u32 [#allocation6], 4
      %s45 = int_to_ptr.vmem [resolvable:$true] %s44
      %50 = dma.hbm_to_vmem [thread:$0]  %s2, 4096, %s45, [#allocation5], 128, 128, 8
    $region13: #{netd_forward.1} parent=1 // pred_fallthru
      _
    // Predicated region
    $region14: #{netd_forward.1} parent=1 // pred_check
      _
    $region15: #{netd_forward.1} parent=1 // pred_check_branch
      %52 = sbr.rel (0) target = $region17
    $region16: #{netd_forward.1} parent=1 // pred_region
      %s54 = ssub.s32 4096, 4096
      %55 = vsyncadd [#allocation8], %s54
      %s56 = sshll.u32 [#allocation7], 4
      %s57 = int_to_ptr.vmem [resolvable:$true] %s56
      %62 = dma.hbm_to_vmem [thread:$0]  %s3, 4096, %s57, [#allocation8], 128, 128, 8
    $region17: #{netd_forward.1} parent=1 // pred_fallthru
      _
    // Predicated region
    $region18: #{netd_forward.1} parent=1 // pred_check
      _
    $region19: #{netd_forward.1} parent=1 // pred_check_branch
      %64 = sbr.rel (0) target = $region21
    $region20: #{netd_forward.1} parent=1 // pred_region
      %s66 = ssub.s32 2048, 2048
      %67 = vsyncadd [#allocation8], %s66
      %s68 = sshll.u32 [#allocation9], 4
      %s69 = int_to_ptr.vmem [resolvable:$true] %s68
      %74 = dma.hbm_to_vmem [thread:$0]  %s4, 2048, %s69, [#allocation8], 64, 64, 4
    $region21: #{netd_forward.1} parent=1 // pred_fallthru
      _
    // Predicated region
    $region22: #{netd_forward.1} parent=1 // pred_check
      _
    $region23: #{netd_forward.1} parent=1 // pred_check_branch
      %76 = sbr.rel (0) target = $region25
    $region24: #{netd_forward.1} parent=1 // pred_region
      %s78 = ssub.s32 256, 256
      %79 = vsyncadd [#allocation11], %s78
      %s81 = sshll.u32 [#allocation10], 4
      %s82 = int_to_ptr.vmem [resolvable:$true] %s81
      %84 = dma.hbm_to_vmem [thread:$0]  %s5, 256, %s82, [#allocation11]
    $region25: #{netd_forward.1} parent=1 // pred_fallthru
      _
    // Predicated region
    $region26: #{netd_forward.1} parent=1 // pred_check
      _
    $region27: #{netd_forward.1} parent=1 // pred_check_branch
      %86 = sbr.rel (0) target = $region29
    $region28: #{netd_forward.1} parent=1 // pred_region
      %87 = dma.done [#allocation3], 128
    $region29: #{netd_forward.1} parent=1 // pred_fallthru
      _
    // Predicated region
    $region30: #{netd_forward.1} parent=1 // pred_check
      _
    $region31: #{netd_forward.1} parent=1 // pred_check_branch
      %89 = sbr.rel (0) target = $region33
    $region32: #{netd_forward.1} parent=1 // pred_region
      %90 = dma.done [#allocation5], 1024
    $region33: #{netd_forward.1} parent=1 // pred_fallthru
      _
    // Predicated region
    $region34: #{netd_forward.1} parent=1 // pred_check
      _
    $region35: #{netd_forward.1} parent=1 // pred_check_branch
      %92 = sbr.rel (0) target = $region37
    $region36: #{netd_forward.1} parent=1 // pred_region
      %93 = dma.done [#allocation5], 4096
    $region37: #{netd_forward.1} parent=1 // pred_fallthru
      _
    // Predicated region
    $region38: #{netd_forward.1} parent=1 // pred_check
      _
    $region39: #{netd_forward.1} parent=1 // pred_check_branch
      %95 = sbr.rel (0) target = $region41
    $region40: #{netd_forward.1} parent=1 // pred_region
      %96 = dma.done [#allocation8], 4096
    $region41: #{netd_forward.1} parent=1 // pred_fallthru
      _
    // Predicated region
    $region42: #{netd_forward.1} parent=1 // pred_check
      _
    $region43: #{netd_forward.1} parent=1 // pred_check_branch
      %98 = sbr.rel (0) target = $region45
    $region44: #{netd_forward.1} parent=1 // pred_region
      %99 = dma.done [#allocation8], 2048
    $region45: #{netd_forward.1} parent=1 // pred_fallthru
      _
    // Predicated region
    $region46: #{netd_forward.1} parent=1 // pred_check
      _
    $region47: #{netd_forward.1} parent=1 // pred_check_branch
      %101 = sbr.rel (0) target = $region49
    $region48: #{netd_forward.1} parent=1 // pred_region
      %102 = dma.done [#allocation11], 256
    $region49: #{netd_forward.1} parent=1 // pred_fallthru
      _
    %v104 = vld [vmem:[#allocation10] sm:$0xff]
    %v105 = vld [vmem:[#allocation10 + $0x8] sm:$0xff]
    %v106 = vld [vmem:[#allocation2] sm:$0xff]
    %v107 = vld [vmem:[#allocation4] sm:$0xff]
    %v108 = vld [vmem:[#allocation4 + $0x8] sm:$0xff]
    %v109 = vld [vmem:[#allocation4 + $0x10] sm:$0xff]
    %v110 = vld [vmem:[#allocation4 + $0x18] sm:$0xff]
    %v111 = vld [vmem:[#allocation4 + $0x20] sm:$0xff]
    %v112 = vld [vmem:[#allocation4 + $0x28] sm:$0xff]
    %v113 = vld [vmem:[#allocation4 + $0x30] sm:$0xff]
    %v114 = vld [vmem:[#allocation4 + $0x38] sm:$0xff]
    %v115 = vpack.c.bf16 %v106, %v106
    %v116 = vlaneseq
    %v117 = vshrl.u32 %v116, 7
    %v118 = vsub.s32 0, %v117
    %v119 = vrot.slane %v104, %v118
    %v120 = vlaneseq
    %v121 = vshrl.u32 %v120, 7
    %v122 = vsub.s32 0, %v121
    %v123 = vrot.slane %v105, %v122
    %v132 = vunpack.c.l.b16 %v107
    %v133 = vunpack.c.h.b16 %v107
    %v134 = vunpack.c.l.b16 %v108
    %v135 = vunpack.c.h.b16 %v108
    %v136 = vunpack.c.l.b16 %v109
    %v137 = vunpack.c.h.b16 %v109
    %v138 = vunpack.c.l.b16 %v110
    %v139 = vunpack.c.h.b16 %v110
    %v140 = vunpack.c.l.b16 %v111
    %v141 = vunpack.c.h.b16 %v111
    %v142 = vunpack.c.l.b16 %v112
    %v143 = vunpack.c.h.b16 %v112
    %v144 = vunpack.c.l.b16 %v113
    %v145 = vunpack.c.h.b16 %v113
    %v146 = vunpack.c.l.b16 %v114
    %v147 = vunpack.c.h.b16 %v114
    %v148 = vpack.c.b16 %v134, %v132
    %v149 = vpack.c.b16 %v135, %v133
    %v150 = vpack.c.b16 %v138, %v136
    %v151 = vpack.c.b16 %v139, %v137
    %v152 = vpack.c.b16 %v142, %v140
    %v153 = vpack.c.b16 %v143, %v141
    %v154 = vpack.c.b16 %v146, %v144
    %v155 = vpack.c.b16 %v147, %v145
    %vm164 = vcmask 523264
    %v166 = vsel %vm164, %v115, 0
    %168 = vmatprep.subr.bf16.mxu0 0
    %169 = vmatpush1.bf16.msra.mxu0 0
    %170 = vmatprep.subr.bf16.mxu0 0
    %171 = vmatpush1.bf16.msra.mxu0 0
    %172 = vmatprep.subr.bf16.mxu0 0
    %173 = vmatpush1.bf16.msra.mxu0 0
    %174 = vmatprep.subr.bf16.mxu0 0
    %175 = vmatpush1.bf16.msra.mxu0 0
    %176 = vmatprep.subr.bf16.mxu0 %v155
    %177 = vmatpush1.bf16.msra.mxu0 %v154
    %178 = vmatprep.subr.bf16.mxu0 %v153
    %179 = vmatpush1.bf16.msra.mxu0 %v152
    %180 = vmatprep.subr.bf16.mxu0 %v151
    %181 = vmatpush1.bf16.msra.mxu0 %v150
    %182 = vmatprep.subr.bf16.mxu0 %v149
    %183 = vmatpush1.bf16.msra.mxu0 %v148
    %184 = vmatprep.subr.bf16.mxu0 0
    %185 = vmatpush2.bf16.msra.mxu0 0
    %186 = vmatprep.subr.bf16.mxu0 0
    %187 = vmatpush2.bf16.msra.mxu0 0
    %188 = vmatprep.subr.bf16.mxu0 0
    %189 = vmatpush2.bf16.msra.mxu0 0
    %190 = vmatprep.subr.bf16.mxu0 0
    %191 = vmatpush2.bf16.msra.mxu0 0
    %192 = vmatprep.subr.bf16.mxu0 0
    %193 = vmatpush2.bf16.msra.mxu0 0
    %194 = vmatprep.subr.bf16.mxu0 0
    %195 = vmatpush2.bf16.msra.mxu0 0
    %196 = vmatprep.subr.bf16.mxu0 0
    %197 = vmatpush2.bf16.msra.mxu0 0
    %198 = vmatprep.subr.bf16.mxu0 0
    %199 = vmatpush2.bf16.msra.mxu0 0
    %200 = vmatprep.mubr.bf16.mxu0 0
    %201 = vmatmul.mubr.bf16.gmra.mxu0 %v166
    %v202 = vpop.f32.mrf.mxu0
    %v203 = vadd.f32 %v119, %v202
    %v204 = vpop.f32.mrf.mxu0
    %v205 = vadd.f32 %v123, %v204
    %v206 = vpop.f32.mrf.mxu0
    %v207 = vpop.f32.mrf.mxu0
    %208 = vdwg.mxu0
    %v209 = vmul.f32 %v203, 0.2
    %v210 = vmul.f32 %v205, 0.2
    %v211 = vmax.f32 %v203, %v209
    %v212 = vmax.f32 %v205, %v210
    %v213 = vld [vmem:[#allocation6] sm:$0xff]
    %v214 = vld [vmem:[#allocation6 + $0x8] sm:$0xff]
    %v215 = vld [vmem:[#allocation6 + $0x10] sm:$0xff]
    %v216 = vld [vmem:[#allocation6 + $0x18] sm:$0xff]
    %v217 = vld [vmem:[#allocation6 + $0x20] sm:$0xff]
    %v218 = vld [vmem:[#allocation6 + $0x28] sm:$0xff]
    %v219 = vld [vmem:[#allocation6 + $0x30] sm:$0xff]
    %v220 = vld [vmem:[#allocation6 + $0x38] sm:$0xff]
    %v221 = vld [vmem:[#allocation6 + $0x40] sm:$0xff]
    %v222 = vld [vmem:[#allocation6 + $0x48] sm:$0xff]
    %v223 = vld [vmem:[#allocation6 + $0x50] sm:$0xff]
    %v224 = vld [vmem:[#allocation6 + $0x58] sm:$0xff]
    %v225 = vld [vmem:[#allocation6 + $0x60] sm:$0xff]
    %v226 = vld [vmem:[#allocation6 + $0x68] sm:$0xff]
    %v227 = vld [vmem:[#allocation6 + $0x70] sm:$0xff]
    %v228 = vld [vmem:[#allocation6 + $0x78] sm:$0xff]
    %v229 = vld [vmem:[#allocation6 + $0x80] sm:$0xff]
    %v230 = vld [vmem:[#allocation6 + $0x88] sm:$0xff]
    %v231 = vld [vmem:[#allocation6 + $0x90] sm:$0xff]
    %v232 = vld [vmem:[#allocation6 + $0x98] sm:$0xff]
    %v233 = vld [vmem:[#allocation6 + $0xa0] sm:$0xff]
    %v234 = vld [vmem:[#allocation6 + $0xa8] sm:$0xff]
    %v235 = vld [vmem:[#allocation6 + $0xb0] sm:$0xff]
    %v236 = vld [vmem:[#allocation6 + $0xb8] sm:$0xff]
    %v237 = vld [vmem:[#allocation6 + $0xc0] sm:$0xff]
    %v238 = vld [vmem:[#allocation6 + $0xc8] sm:$0xff]
    %v239 = vld [vmem:[#allocation6 + $0xd0] sm:$0xff]
    %v240 = vld [vmem:[#allocation6 + $0xd8] sm:$0xff]
    %v241 = vld [vmem:[#allocation6 + $0xe0] sm:$0xff]
    %v242 = vld [vmem:[#allocation6 + $0xe8] sm:$0xff]
    %v243 = vld [vmem:[#allocation6 + $0xf0] sm:$0xff]
    %v244 = vld [vmem:[#allocation6 + $0xf8] sm:$0xff]
    %v245 = vpack.c.bf16 %v211, %v211
    %v246 = vpack.c.bf16 %v212, %v212
    %v279 = vunpack.c.l.b16 %v213
    %v280 = vunpack.c.h.b16 %v213
    %v281 = vunpack.c.l.b16 %v214
    %v282 = vunpack.c.h.b16 %v214
    %v283 = vunpack.c.l.b16 %v215
    %v284 = vunpack.c.h.b16 %v215
    %v285 = vunpack.c.l.b16 %v216
    %v286 = vunpack.c.h.b16 %v216
    %v287 = vunpack.c.l.b16 %v217
    %v288 = vunpack.c.h.b16 %v217
    %v289 = vunpack.c.l.b16 %v218
    %v290 = vunpack.c.h.b16 %v218
    %v291 = vunpack.c.l.b16 %v219
    %v292 = vunpack.c.h.b16 %v219
    %v293 = vunpack.c.l.b16 %v220
    %v294 = vunpack.c.h.b16 %v220
    %v295 = vunpack.c.l.b16 %v221
    %v296 = vunpack.c.h.b16 %v221
    %v297 = vunpack.c.l.b16 %v222
    %v298 = vunpack.c.h.b16 %v222
    %v299 = vunpack.c.l.b16 %v223
    %v300 = vunpack.c.h.b16 %v223
    %v301 = vunpack.c.l.b16 %v224
    %v302 = vunpack.c.h.b16 %v224
    %v303 = vunpack.c.l.b16 %v225
    %v304 = vunpack.c.h.b16 %v225
    %v305 = vunpack.c.l.b16 %v226
    %v306 = vunpack.c.h.b16 %v226
    %v307 = vunpack.c.l.b16 %v227
    %v308 = vunpack.c.h.b16 %v227
    %v309 = vunpack.c.l.b16 %v228
    %v310 = vunpack.c.h.b16 %v228
    %v311 = vunpack.c.l.b16 %v229
    %v312 = vunpack.c.h.b16 %v229
    %v313 = vunpack.c.l.b16 %v230
    %v314 = vunpack.c.h.b16 %v230
    %v315 = vunpack.c.l.b16 %v231
    %v316 = vunpack.c.h.b16 %v231
    %v317 = vunpack.c.l.b16 %v232
    %v318 = vunpack.c.h.b16 %v232
    %v319 = vunpack.c.l.b16 %v233
    %v320 = vunpack.c.h.b16 %v233
    %v321 = vunpack.c.l.b16 %v234
    %v322 = vunpack.c.h.b16 %v234
    %v323 = vunpack.c.l.b16 %v235
    %v324 = vunpack.c.h.b16 %v235
    %v325 = vunpack.c.l.b16 %v236
    %v326 = vunpack.c.h.b16 %v236
    %v327 = vunpack.c.l.b16 %v237
    %v328 = vunpack.c.h.b16 %v237
    %v329 = vunpack.c.l.b16 %v238
    %v330 = vunpack.c.h.b16 %v238
    %v331 = vunpack.c.l.b16 %v239
    %v332 = vunpack.c.h.b16 %v239
    %v333 = vunpack.c.l.b16 %v240
    %v334 = vunpack.c.h.b16 %v240
    %v335 = vunpack.c.l.b16 %v241
    %v336 = vunpack.c.h.b16 %v241
    %v337 = vunpack.c.l.b16 %v242
    %v338 = vunpack.c.h.b16 %v242
    %v339 = vunpack.c.l.b16 %v243
    %v340 = vunpack.c.h.b16 %v243
    %v341 = vunpack.c.l.b16 %v244
    %v342 = vunpack.c.h.b16 %v244
    %v343 = vpack.c.b16 %v281, %v279
    %v344 = vpack.c.b16 %v282, %v280
    %v345 = vpack.c.b16 %v285, %v283
    %v346 = vpack.c.b16 %v286, %v284
    %v347 = vpack.c.b16 %v289, %v287
    %v348 = vpack.c.b16 %v290, %v288
    %v349 = vpack.c.b16 %v293, %v291
    %v350 = vpack.c.b16 %v294, %v292
    %v351 = vpack.c.b16 %v297, %v295
    %v352 = vpack.c.b16 %v298, %v296
    %v353 = vpack.c.b16 %v301, %v299
    %v354 = vpack.c.b16 %v302, %v300
    %v355 = vpack.c.b16 %v305, %v303
    %v356 = vpack.c.b16 %v306, %v304
    %v357 = vpack.c.b16 %v309, %v307
    %v358 = vpack.c.b16 %v310, %v308
    %v359 = vpack.c.b16 %v313, %v311
    %v360 = vpack.c.b16 %v314, %v312
    %v361 = vpack.c.b16 %v317, %v315
    %v362 = vpack.c.b16 %v318, %v316
    %v363 = vpack.c.b16 %v321, %v319
    %v364 = vpack.c.b16 %v322, %v320
    %v365 = vpack.c.b16 %v325, %v323
    %v366 = vpack.c.b16 %v326, %v324
    %v367 = vpack.c.b16 %v329, %v327
    %v368 = vpack.c.b16 %v330, %v328
    %v369 = vpack.c.b16 %v333, %v331
    %v370 = vpack.c.b16 %v334, %v332
    %v371 = vpack.c.b16 %v337, %v335
    %v372 = vpack.c.b16 %v338, %v336
    %v373 = vpack.c.b16 %v341, %v339
    %v374 = vpack.c.b16 %v342, %v340
    %407 = vmatprep.subr.bf16.mxu0 %v358
    %408 = vmatpush1.bf16.msra.mxu0 %v357
    %409 = vmatprep.subr.bf16.mxu0 %v356
    %410 = vmatpush1.bf16.msra.mxu0 %v355
    %411 = vmatprep.subr.bf16.mxu0 %v354
    %412 = vmatpush1.bf16.msra.mxu0 %v353
    %413 = vmatprep.subr.bf16.mxu0 %v352
    %414 = vmatpush1.bf16.msra.mxu0 %v351
    %415 = vmatprep.subr.bf16.mxu0 %v350
    %416 = vmatpush1.bf16.msra.mxu0 %v349
    %417 = vmatprep.subr.bf16.mxu0 %v348
    %418 = vmatpush1.bf16.msra.mxu0 %v347
    %419 = vmatprep.subr.bf16.mxu0 %v346
    %420 = vmatpush1.bf16.msra.mxu0 %v345
    %421 = vmatprep.subr.bf16.mxu0 %v344
    %422 = vmatpush1.bf16.msra.mxu0 %v343
    %423 = vmatprep.subr.bf16.mxu0 %v374
    %424 = vmatpush2.bf16.msra.mxu0 %v373
    %425 = vmatprep.subr.bf16.mxu0 %v372
    %426 = vmatpush2.bf16.msra.mxu0 %v371
    %427 = vmatprep.subr.bf16.mxu0 %v370
    %428 = vmatpush2.bf16.msra.mxu0 %v369
    %429 = vmatprep.subr.bf16.mxu0 %v368
    %430 = vmatpush2.bf16.msra.mxu0 %v367
    %431 = vmatprep.subr.bf16.mxu0 %v366
    %432 = vmatpush2.bf16.msra.mxu0 %v365
    %433 = vmatprep.subr.bf16.mxu0 %v364
    %434 = vmatpush2.bf16.msra.mxu0 %v363
    %435 = vmatprep.subr.bf16.mxu0 %v362
    %436 = vmatpush2.bf16.msra.mxu0 %v361
    %437 = vmatprep.subr.bf16.mxu0 %v360
    %438 = vmatpush2.bf16.msra.mxu0 %v359
    %439 = vmatprep.mubr.bf16.mxu0 %v246
    %440 = vmatmul.mubr.bf16.gmra.mxu0 %v245
    %v441 = vpop.f32.mrf.mxu0
    %v442 = vadd.f32 0.0, %v441
    %v443 = vpop.f32.mrf.mxu0
    %v444 = vadd.f32 0.0, %v443
    %v445 = vpop.f32.mrf.mxu0
    %v446 = vpop.f32.mrf.mxu0
    %447 = vdwg.mxu0
    %v448 = vrot.slane %v442, 4
    %v449 = vadd.f32 %v442, %v448
    %v450 = vrot.slane %v449, 2
    %v451 = vadd.f32 %v449, %v450
    %v452 = vrot.slane %v451, 1
    %v453 = vadd.f32 %v451, %v452
    %v454 = vrot.slane %v444, 4
    %v455 = vadd.f32 %v444, %v454
    %v456 = vrot.slane %v455, 2
    %v457 = vadd.f32 %v455, %v456
    %v458 = vrot.slane %v457, 1
    %v459 = vadd.f32 %v457, %v458
    %v460 = vrcp.pop 8.0
    %v461 = vmul.f32 %v453, %v460
    %v462 = vmul.f32 %v459, %v460
    %v463 = vadd.f32 %v461, %v462
    %464 = vrot.lane.b32.xlu0 %v463, 64
    %v465 = vpop.permute.xlu0 %464
    %v466 = vlaneseq
    %v467 = vand.u32 %v466, 127
    %v468 = vadd.f32 %v463, %v465
    %469 = vrot.lane.b32.xlu0 %v468, 32
    %v470 = vpop.permute.xlu0 %469
    %v471 = vadd.f32 %v468, %v470
    %v472 = vmul.f32 %v471, 0.125
    %v473 = vlaneseq
    %v474 = vshrl.u32 %v473, 7
    %v475 = vsub.s32 0, %v474
    %v476 = vrot.slane %v472, %v475
    %v477 = vsub.f32 %v442, %v476
    %v478 = vsub.f32 %v444, %v476
    %v479 = vmul.f32 %v477, %v477
    %v480 = vmul.f32 %v478, %v478
    %v481 = vrot.slane %v479, 4
    %v482 = vadd.f32 %v479, %v481
    %v483 = vrot.slane %v482, 2
    %v484 = vadd.f32 %v482, %v483
    %v485 = vrot.slane %v484, 1
    %v486 = vadd.f32 %v484, %v485
    %v487 = vrot.slane %v480, 4
    %v488 = vadd.f32 %v480, %v487
    %v489 = vrot.slane %v488, 2
    %v490 = vadd.f32 %v488, %v489
    %v491 = vrot.slane %v490, 1
    %v492 = vadd.f32 %v490, %v491
    %v493 = vmul.f32 %v486, %v460
    %v494 = vmul.f32 %v492, %v460
    %v495 = vadd.f32 %v493, %v494
    %496 = vrot.lane.b32.xlu0 %v495, 64
    %v497 = vpop.permute.xlu0 %496
    %v498 = vadd.f32 %v495, %v497
    %499 = vrot.lane.b32.xlu0 %v498, 32
    %v500 = vpop.permute.xlu0 %499
    %v501 = vadd.f32 %v498, %v500
    %v502 = vmul.f32 %v501, 0.125
    %v503 = vadd.f32 %v502, 1e-05
    %v504 = vrsqrt.pop %v503
    %v506 = vrot.slane %v504, 7
    %v508 = vmul.f32 %v104, %v506
    %v509 = vmul.f32 %v105, %v506
    %v510 = vlaneseq
    %v511 = vshrl.u32 %v510, 7
    %v512 = vsub.s32 1, %v511
    %v513 = vrot.slane %v508, %v512
    %v514 = vlaneseq
    %v515 = vshrl.u32 %v514, 7
    %v516 = vsub.s32 1, %v515
    %v517 = vrot.slane %v509, %v516
    %v518 = vmul.f32 %v477, %v513
    %v519 = vmul.f32 %v478, %v517
    %v520 = vlaneseq
    %v521 = vshrl.u32 %v520, 7
    %v522 = vsub.s32 2, %v521
    %v523 = vrot.slane %v104, %v522
    %v524 = vlaneseq
    %v525 = vshrl.u32 %v524, 7
    %v526 = vsub.s32 2, %v525
    %v527 = vrot.slane %v105, %v526
    %v528 = vadd.f32 %v518, %v523
    %v529 = vadd.f32 %v519, %v527
    %v530 = vmul.f32 %v528, 0.2
    %v531 = vmul.f32 %v529, 0.2
    %v532 = vmax.f32 %v528, %v530
    %v533 = vmax.f32 %v529, %v531
    %v534 = vld [vmem:[#allocation7] sm:$0xff]
    %v535 = vld [vmem:[#allocation7 + $0x8] sm:$0xff]
    %v536 = vld [vmem:[#allocation7 + $0x10] sm:$0xff]
    %v537 = vld [vmem:[#allocation7 + $0x18] sm:$0xff]
    %v538 = vld [vmem:[#allocation7 + $0x20] sm:$0xff]
    %v539 = vld [vmem:[#allocation7 + $0x28] sm:$0xff]
    %v540 = vld [vmem:[#allocation7 + $0x30] sm:$0xff]
    %v541 = vld [vmem:[#allocation7 + $0x38] sm:$0xff]
    %v542 = vld [vmem:[#allocation7 + $0x40] sm:$0xff]
    %v543 = vld [vmem:[#allocation7 + $0x48] sm:$0xff]
    %v544 = vld [vmem:[#allocation7 + $0x50] sm:$0xff]
    %v545 = vld [vmem:[#allocation7 + $0x58] sm:$0xff]
    %v546 = vld [vmem:[#allocation7 + $0x60] sm:$0xff]
    %v547 = vld [vmem:[#allocation7 + $0x68] sm:$0xff]
    %v548 = vld [vmem:[#allocation7 + $0x70] sm:$0xff]
    %v549 = vld [vmem:[#allocation7 + $0x78] sm:$0xff]
    %v550 = vld [vmem:[#allocation7 + $0x80] sm:$0xff]
    %v551 = vld [vmem:[#allocation7 + $0x88] sm:$0xff]
    %v552 = vld [vmem:[#allocation7 + $0x90] sm:$0xff]
    %v553 = vld [vmem:[#allocation7 + $0x98] sm:$0xff]
    %v554 = vld [vmem:[#allocation7 + $0xa0] sm:$0xff]
    %v555 = vld [vmem:[#allocation7 + $0xa8] sm:$0xff]
    %v556 = vld [vmem:[#allocation7 + $0xb0] sm:$0xff]
    %v557 = vld [vmem:[#allocation7 + $0xb8] sm:$0xff]
    %v558 = vld [vmem:[#allocation7 + $0xc0] sm:$0xff]
    %v559 = vld [vmem:[#allocation7 + $0xc8] sm:$0xff]
    %v560 = vld [vmem:[#allocation7 + $0xd0] sm:$0xff]
    %v561 = vld [vmem:[#allocation7 + $0xd8] sm:$0xff]
    %v562 = vld [vmem:[#allocation7 + $0xe0] sm:$0xff]
    %v563 = vld [vmem:[#allocation7 + $0xe8] sm:$0xff]
    %v564 = vld [vmem:[#allocation7 + $0xf0] sm:$0xff]
    %v565 = vld [vmem:[#allocation7 + $0xf8] sm:$0xff]
    %v566 = vpack.c.bf16 %v532, %v532
    %v567 = vpack.c.bf16 %v533, %v533
    %v600 = vunpack.c.l.b16 %v534
    %v601 = vunpack.c.h.b16 %v534
    %v602 = vunpack.c.l.b16 %v535
    %v603 = vunpack.c.h.b16 %v535
    %v604 = vunpack.c.l.b16 %v536
    %v605 = vunpack.c.h.b16 %v536
    %v606 = vunpack.c.l.b16 %v537
    %v607 = vunpack.c.h.b16 %v537
    %v608 = vunpack.c.l.b16 %v538
    %v609 = vunpack.c.h.b16 %v538
    %v610 = vunpack.c.l.b16 %v539
    %v611 = vunpack.c.h.b16 %v539
    %v612 = vunpack.c.l.b16 %v540
    %v613 = vunpack.c.h.b16 %v540
    %v614 = vunpack.c.l.b16 %v541
    %v615 = vunpack.c.h.b16 %v541
    %v616 = vunpack.c.l.b16 %v542
    %v617 = vunpack.c.h.b16 %v542
    %v618 = vunpack.c.l.b16 %v543
    %v619 = vunpack.c.h.b16 %v543
    %v620 = vunpack.c.l.b16 %v544
    %v621 = vunpack.c.h.b16 %v544
    %v622 = vunpack.c.l.b16 %v545
    %v623 = vunpack.c.h.b16 %v545
    %v624 = vunpack.c.l.b16 %v546
    %v625 = vunpack.c.h.b16 %v546
    %v626 = vunpack.c.l.b16 %v547
    %v627 = vunpack.c.h.b16 %v547
    %v628 = vunpack.c.l.b16 %v548
    %v629 = vunpack.c.h.b16 %v548
    %v630 = vunpack.c.l.b16 %v549
    %v631 = vunpack.c.h.b16 %v549
    %v632 = vunpack.c.l.b16 %v550
    %v633 = vunpack.c.h.b16 %v550
    %v634 = vunpack.c.l.b16 %v551
    %v635 = vunpack.c.h.b16 %v551
    %v636 = vunpack.c.l.b16 %v552
    %v637 = vunpack.c.h.b16 %v552
    %v638 = vunpack.c.l.b16 %v553
    %v639 = vunpack.c.h.b16 %v553
    %v640 = vunpack.c.l.b16 %v554
    %v641 = vunpack.c.h.b16 %v554
    %v642 = vunpack.c.l.b16 %v555
    %v643 = vunpack.c.h.b16 %v555
    %v644 = vunpack.c.l.b16 %v556
    %v645 = vunpack.c.h.b16 %v556
    %v646 = vunpack.c.l.b16 %v557
    %v647 = vunpack.c.h.b16 %v557
    %v648 = vunpack.c.l.b16 %v558
    %v649 = vunpack.c.h.b16 %v558
    %v650 = vunpack.c.l.b16 %v559
    %v651 = vunpack.c.h.b16 %v559
    %v652 = vunpack.c.l.b16 %v560
    %v653 = vunpack.c.h.b16 %v560
    %v654 = vunpack.c.l.b16 %v561
    %v655 = vunpack.c.h.b16 %v561
    %v656 = vunpack.c.l.b16 %v562
    %v657 = vunpack.c.h.b16 %v562
    %v658 = vunpack.c.l.b16 %v563
    %v659 = vunpack.c.h.b16 %v563
    %v660 = vunpack.c.l.b16 %v564
    %v661 = vunpack.c.h.b16 %v564
    %v662 = vunpack.c.l.b16 %v565
    %v663 = vunpack.c.h.b16 %v565
    %v664 = vpack.c.b16 %v602, %v600
    %v665 = vpack.c.b16 %v603, %v601
    %v666 = vpack.c.b16 %v606, %v604
    %v667 = vpack.c.b16 %v607, %v605
    %v668 = vpack.c.b16 %v610, %v608
    %v669 = vpack.c.b16 %v611, %v609
    %v670 = vpack.c.b16 %v614, %v612
    %v671 = vpack.c.b16 %v615, %v613
    %v672 = vpack.c.b16 %v618, %v616
    %v673 = vpack.c.b16 %v619, %v617
    %v674 = vpack.c.b16 %v622, %v620
    %v675 = vpack.c.b16 %v623, %v621
    %v676 = vpack.c.b16 %v626, %v624
    %v677 = vpack.c.b16 %v627, %v625
    %v678 = vpack.c.b16 %v630, %v628
    %v679 = vpack.c.b16 %v631, %v629
    %v680 = vpack.c.b16 %v634, %v632
    %v681 = vpack.c.b16 %v635, %v633
    %v682 = vpack.c.b16 %v638, %v636
    %v683 = vpack.c.b16 %v639, %v637
    %v684 = vpack.c.b16 %v642, %v640
    %v685 = vpack.c.b16 %v643, %v641
    %v686 = vpack.c.b16 %v646, %v644
    %v687 = vpack.c.b16 %v647, %v645
    %v688 = vpack.c.b16 %v650, %v648
    %v689 = vpack.c.b16 %v651, %v649
    %v690 = vpack.c.b16 %v654, %v652
    %v691 = vpack.c.b16 %v655, %v653
    %v692 = vpack.c.b16 %v658, %v656
    %v693 = vpack.c.b16 %v659, %v657
    %v694 = vpack.c.b16 %v662, %v660
    %v695 = vpack.c.b16 %v663, %v661
    %728 = vmatprep.subr.bf16.mxu0 %v679
    %729 = vmatpush1.bf16.msra.mxu0 %v678
    %730 = vmatprep.subr.bf16.mxu0 %v677
    %731 = vmatpush1.bf16.msra.mxu0 %v676
    %732 = vmatprep.subr.bf16.mxu0 %v675
    %733 = vmatpush1.bf16.msra.mxu0 %v674
    %734 = vmatprep.subr.bf16.mxu0 %v673
    %735 = vmatpush1.bf16.msra.mxu0 %v672
    %736 = vmatprep.subr.bf16.mxu0 %v671
    %737 = vmatpush1.bf16.msra.mxu0 %v670
    %738 = vmatprep.subr.bf16.mxu0 %v669
    %739 = vmatpush1.bf16.msra.mxu0 %v668
    %740 = vmatprep.subr.bf16.mxu0 %v667
    %741 = vmatpush1.bf16.msra.mxu0 %v666
    %742 = vmatprep.subr.bf16.mxu0 %v665
    %743 = vmatpush1.bf16.msra.mxu0 %v664
    %744 = vmatprep.subr.bf16.mxu0 %v695
    %745 = vmatpush2.bf16.msra.mxu0 %v694
    %746 = vmatprep.subr.bf16.mxu0 %v693
    %747 = vmatpush2.bf16.msra.mxu0 %v692
    %748 = vmatprep.subr.bf16.mxu0 %v691
    %749 = vmatpush2.bf16.msra.mxu0 %v690
    %750 = vmatprep.subr.bf16.mxu0 %v689
    %751 = vmatpush2.bf16.msra.mxu0 %v688
    %752 = vmatprep.subr.bf16.mxu0 %v687
    %753 = vmatpush2.bf16.msra.mxu0 %v686
    %754 = vmatprep.subr.bf16.mxu0 %v685
    %755 = vmatpush2.bf16.msra.mxu0 %v684
    %756 = vmatprep.subr.bf16.mxu0 %v683
    %757 = vmatpush2.bf16.msra.mxu0 %v682
    %758 = vmatprep.subr.bf16.mxu0 %v681
    %759 = vmatpush2.bf16.msra.mxu0 %v680
    %760 = vmatprep.mubr.bf16.mxu0 %v567
    %761 = vmatmul.mubr.bf16.gmra.mxu0 %v566
    %v762 = vpop.f32.mrf.mxu0
    %v763 = vadd.f32 0.0, %v762
    %v764 = vpop.f32.mrf.mxu0
    %v765 = vadd.f32 0.0, %v764
    %v766 = vpop.f32.mrf.mxu0
    %v767 = vpop.f32.mrf.mxu0
    %768 = vdwg.mxu0
    %v769 = vrot.slane %v763, 4
    %v770 = vadd.f32 %v763, %v769
    %v771 = vrot.slane %v770, 2
    %v772 = vadd.f32 %v770, %v771
    %v773 = vrot.slane %v772, 1
    %v774 = vadd.f32 %v772, %v773
    %v775 = vrot.slane %v765, 4
    %v776 = vadd.f32 %v765, %v775
    %v777 = vrot.slane %v776, 2
    %v778 = vadd.f32 %v776, %v777
    %v779 = vrot.slane %v778, 1
    %v780 = vadd.f32 %v778, %v779
    %v781 = vmul.f32 %v774, %v460
    %v782 = vmul.f32 %v780, %v460
    %v783 = vadd.f32 %v781, %v782
    %784 = vrot.lane.b32.xlu0 %v783, 64
    %v785 = vpop.permute.xlu0 %784
    %v786 = vadd.f32 %v783, %v785
    %v787 = vmul.f32 %v786, 0.25
    %v788 = vlaneseq
    %v789 = vshrl.u32 %v788, 7
    %v790 = vsub.s32 0, %v789
    %v791 = vrot.slane %v787, %v790
    %v792 = vsub.f32 %v763, %v791
    %v793 = vsub.f32 %v765, %v791
    %v794 = vmul.f32 %v792, %v792
    %v795 = vmul.f32 %v793, %v793
    %v796 = vrot.slane %v794, 4
    %v797 = vadd.f32 %v794, %v796
    %v798 = vrot.slane %v797, 2
    %v799 = vadd.f32 %v797, %v798
    %v800 = vrot.slane %v799, 1
    %v801 = vadd.f32 %v799, %v800
    %v802 = vrot.slane %v795, 4
    %v803 = vadd.f32 %v795, %v802
    %v804 = vrot.slane %v803, 2
    %v805 = vadd.f32 %v803, %v804
    %v806 = vrot.slane %v805, 1
    %v807 = vadd.f32 %v805, %v806
    %v808 = vmul.f32 %v801, %v460
    %v809 = vmul.f32 %v807, %v460
    %v810 = vadd.f32 %v808, %v809
    %811 = vrot.lane.b32.xlu0 %v810, 64
    %v812 = vpop.permute.xlu0 %811
    %v813 = vadd.f32 %v810, %v812
    %v814 = vmul.f32 %v813, 0.25
    %v815 = vadd.f32 %v814, 1e-05
    %v816 = vrsqrt.pop %v815
    %v818 = vrot.slane %v816, 5
    %v820 = vmul.f32 %v104, %v818
    %v821 = vmul.f32 %v105, %v818
    %v822 = vlaneseq
    %v823 = vshrl.u32 %v822, 7
    %v824 = vsub.s32 3, %v823
    %v825 = vrot.slane %v820, %v824
    %v826 = vlaneseq
    %v827 = vshrl.u32 %v826, 7
    %v828 = vsub.s32 3, %v827
    %v829 = vrot.slane %v821, %v828
    %v830 = vmul.f32 %v792, %v825
    %v831 = vmul.f32 %v793, %v829
    %v832 = vlaneseq
    %v833 = vshrl.u32 %v832, 7
    %v834 = vsub.s32 4, %v833
    %v835 = vrot.slane %v104, %v834
    %v836 = vlaneseq
    %v837 = vshrl.u32 %v836, 7
    %v838 = vsub.s32 4, %v837
    %v839 = vrot.slane %v105, %v838
    %v840 = vadd.f32 %v830, %v835
    %v841 = vadd.f32 %v831, %v839
    %v842 = vmul.f32 %v840, 0.2
    %v843 = vmul.f32 %v841, 0.2
    %v844 = vmax.f32 %v840, %v842
    %v845 = vmax.f32 %v841, %v843
    %846 = vst [vmem:[%s7] sm:$0xff] %v844
    %847 = vst [vmem:[%s7 + $0x8] sm:$0xff] %v845
    %v848 = vld [vmem:[#allocation9] sm:$0xf]
    %v849 = vld [vmem:[#allocation9 + $0x4] sm:$0xf]
    %v850 = vld [vmem:[#allocation9 + $0x8] sm:$0xf]
    %v851 = vld [vmem:[#allocation9 + $0xc] sm:$0xf]
    %v852 = vld [vmem:[#allocation9 + $0x10] sm:$0xf]
    %v853 = vld [vmem:[#allocation9 + $0x14] sm:$0xf]
    %v854 = vld [vmem:[#allocation9 + $0x18] sm:$0xf]
    %v855 = vld [vmem:[#allocation9 + $0x1c] sm:$0xf]
    %v856 = vld [vmem:[#allocation9 + $0x20] sm:$0xf]
    %v857 = vld [vmem:[#allocation9 + $0x24] sm:$0xf]
    %v858 = vld [vmem:[#allocation9 + $0x28] sm:$0xf]
    %v859 = vld [vmem:[#allocation9 + $0x2c] sm:$0xf]
    %v860 = vld [vmem:[#allocation9 + $0x30] sm:$0xf]
    %v861 = vld [vmem:[#allocation9 + $0x34] sm:$0xf]
    %v862 = vld [vmem:[#allocation9 + $0x38] sm:$0xf]
    %v863 = vld [vmem:[#allocation9 + $0x3c] sm:$0xf]
    %v864 = vld [vmem:[#allocation9 + $0x40] sm:$0xf]
    %v865 = vld [vmem:[#allocation9 + $0x44] sm:$0xf]
    %v866 = vld [vmem:[#allocation9 + $0x48] sm:$0xf]
    %v867 = vld [vmem:[#allocation9 + $0x4c] sm:$0xf]
    %v868 = vld [vmem:[#allocation9 + $0x50] sm:$0xf]
    %v869 = vld [vmem:[#allocation9 + $0x54] sm:$0xf]
    %v870 = vld [vmem:[#allocation9 + $0x58] sm:$0xf]
    %v871 = vld [vmem:[#allocation9 + $0x5c] sm:$0xf]
    %v872 = vld [vmem:[#allocation9 + $0x60] sm:$0xf]
    %v873 = vld [vmem:[#allocation9 + $0x64] sm:$0xf]
    %v874 = vld [vmem:[#allocation9 + $0x68] sm:$0xf]
    %v875 = vld [vmem:[#allocation9 + $0x6c] sm:$0xf]
    %v876 = vld [vmem:[#allocation9 + $0x70] sm:$0xf]
    %v877 = vld [vmem:[#allocation9 + $0x74] sm:$0xf]
    %v878 = vld [vmem:[#allocation9 + $0x78] sm:$0xf]
    %v879 = vld [vmem:[#allocation9 + $0x7c] sm:$0xf]
    %v880 = vpack.c.bf16 %v844, %v844
    %v881 = vpack.c.bf16 %v845, %v845
    %v914 = vunpack.c.l.b16 %v848
    %v915 = vunpack.c.l.b16 %v849
    %v916 = vunpack.c.l.b16 %v850
    %v917 = vunpack.c.l.b16 %v851
    %v918 = vunpack.c.l.b16 %v852
    %v919 = vunpack.c.l.b16 %v853
    %v920 = vunpack.c.l.b16 %v854
    %v921 = vunpack.c.l.b16 %v855
    %v922 = vunpack.c.l.b16 %v856
    %v923 = vunpack.c.l.b16 %v857
    %v924 = vunpack.c.l.b16 %v858
    %v925 = vunpack.c.l.b16 %v859
    %v926 = vunpack.c.l.b16 %v860
    %v927 = vunpack.c.l.b16 %v861
    %v928 = vunpack.c.l.b16 %v862
    %v929 = vunpack.c.l.b16 %v863
    %v930 = vunpack.c.l.b16 %v864
    %v931 = vunpack.c.l.b16 %v865
    %v932 = vunpack.c.l.b16 %v866
    %v933 = vunpack.c.l.b16 %v867
    %v934 = vunpack.c.l.b16 %v868
    %v935 = vunpack.c.l.b16 %v869
    %v936 = vunpack.c.l.b16 %v870
    %v937 = vunpack.c.l.b16 %v871
    %v938 = vunpack.c.l.b16 %v872
    %v939 = vunpack.c.l.b16 %v873
    %v940 = vunpack.c.l.b16 %v874
    %v941 = vunpack.c.l.b16 %v875
    %v942 = vunpack.c.l.b16 %v876
    %v943 = vunpack.c.l.b16 %v877
    %v944 = vunpack.c.l.b16 %v878
    %v945 = vunpack.c.l.b16 %v879
    %v946 = vpack.c.b16 %v915, %v914
    %v947 = vpack.c.b16 %v917, %v916
    %v948 = vpack.c.b16 %v919, %v918
    %v949 = vpack.c.b16 %v921, %v920
    %v950 = vpack.c.b16 %v923, %v922
    %v951 = vpack.c.b16 %v925, %v924
    %v952 = vpack.c.b16 %v927, %v926
    %v953 = vpack.c.b16 %v929, %v928
    %v954 = vpack.c.b16 %v931, %v930
    %v955 = vpack.c.b16 %v933, %v932
    %v956 = vpack.c.b16 %v935, %v934
    %v957 = vpack.c.b16 %v937, %v936
    %v958 = vpack.c.b16 %v939, %v938
    %v959 = vpack.c.b16 %v941, %v940
    %v960 = vpack.c.b16 %v943, %v942
    %v961 = vpack.c.b16 %v945, %v944
    %978 = vmatprep.subr.bf16.mxu0 0
    %979 = vmatpush1.bf16.msra.mxu0 %v953
    %980 = vmatprep.subr.bf16.mxu0 0
    %981 = vmatpush1.bf16.msra.mxu0 %v952
    %982 = vmatprep.subr.bf16.mxu0 0
    %983 = vmatpush1.bf16.msra.mxu0 %v951
    %984 = vmatprep.subr.bf16.mxu0 0
    %985 = vmatpush1.bf16.msra.mxu0 %v950
    %986 = vmatprep.subr.bf16.mxu0 0
    %987 = vmatpush1.bf16.msra.mxu0 %v949
    %988 = vmatprep.subr.bf16.mxu0 0
    %989 = vmatpush1.bf16.msra.mxu0 %v948
    %990 = vmatprep.subr.bf16.mxu0 0
    %991 = vmatpush1.bf16.msra.mxu0 %v947
    %992 = vmatprep.subr.bf16.mxu0 0
    %993 = vmatpush1.bf16.msra.mxu0 %v946
    %994 = vmatprep.subr.bf16.mxu0 0
    %995 = vmatpush2.bf16.msra.mxu0 %v961
    %996 = vmatprep.subr.bf16.mxu0 0
    %997 = vmatpush2.bf16.msra.mxu0 %v960
    %998 = vmatprep.subr.bf16.mxu0 0
    %999 = vmatpush2.bf16.msra.mxu0 %v959
    %1000 = vmatprep.subr.bf16.mxu0 0
    %1001 = vmatpush2.bf16.msra.mxu0 %v958
    %1002 = vmatprep.subr.bf16.mxu0 0
    %1003 = vmatpush2.bf16.msra.mxu0 %v957
    %1004 = vmatprep.subr.bf16.mxu0 0
    %1005 = vmatpush2.bf16.msra.mxu0 %v956
    %1006 = vmatprep.subr.bf16.mxu0 0
    %1007 = vmatpush2.bf16.msra.mxu0 %v955
    %1008 = vmatprep.subr.bf16.mxu0 0
    %1009 = vmatpush2.bf16.msra.mxu0 %v954
    %1010 = vmatprep.mubr.bf16.mxu0 %v881
    %1011 = vmatmul.mubr.bf16.gmra.mxu0 %v880
    %v1012 = vpop.f32.mrf.mxu0
    %v1013 = vadd.f32 0.0, %v1012
    %v1014 = vpop.f32.mrf.mxu0
    %v1015 = vpop.f32.mrf.mxu0
    %v1016 = vpop.f32.mrf.mxu0
    %1017 = vdwg.mxu0
    %v1018 = vand.u32 2147483647, %v1013
    %v1019 = vsub.f32 0.0, %v1018
    %v1020 = vmul.f32 %v1019, 1.442695
    %v1021 = vpow.pop %v1020
    %vm1022 = vcmp.ge.f32.partialorder %v1013, 0.0
    %v1023 = vsel %vm1022, 1.0, %v1021
    %v1024 = vadd.f32 %v1021, 1.0
    %v1025 = vrcp.pop %v1024
    %v1026 = vmul.f32 %v1023, %v1025
    %1027 = vst [vmem:[%s6] sm:$0xff] %v1026
    // Predicated region
    $region50: #{netd_forward.1} parent=1 // pred_check
      _
    $region51: #{netd_forward.1} parent=1 // pred_check_branch
      %1029 = sbr.rel (0) target = $region53
    $region52: #{netd_forward.1} parent=1 // pred_region
      _
    $region53: #{netd_forward.1} parent=1 // pred_fallthru
      _
    // Predicated region
    $region54: #{netd_forward.1} parent=1 // pred_check
      _
    $region55: #{netd_forward.1} parent=1 // pred_check_branch
      %1031 = sbr.rel (0) target = $region57
    $region56: #{netd_forward.1} parent=1 // pred_region
      _
    $region57: #{netd_forward.1} parent=1 // pred_fallthru
      _
    // Predicated region
    $region58: #{netd_forward.1} parent=1 // pred_check
      _
    $region59: #{netd_forward.1} parent=1 // pred_check_branch
      %1033 = sbr.rel (0) target = $region61
    $region60: #{netd_forward.1} parent=1 // pred_region
      _
    $region61: #{netd_forward.1} parent=1 // pred_fallthru
      _
    // Predicated region
    $region62: #{netd_forward.1} parent=1 // pred_check
      _
    $region63: #{netd_forward.1} parent=1 // pred_check_branch
      %1035 = sbr.rel (0) target = $region65
    $region64: #{netd_forward.1} parent=1 // pred_region
      _
    $region65: #{netd_forward.1} parent=1 // pred_fallthru
      _
    %1036 = vsyncpa [#allocation3], 1
    %1037 = vsyncpa [#allocation5], 1
    %1038 = vsyncpa [#allocation8], 1
    %1039 = vsyncpa [#allocation11], 1

</llo_original>
